<compile_context>
chip_gen: v6e
topology: v6e:2x2x1
jax: 0.10.0
libtpu: 0.0.40
codegen_flags: <defaults>
</compile_context>

<pallas_src>
import functools

import jax
import jax.numpy as jnp
import numpy as np
from jax import lax
from jax.experimental import pallas as pl
from jax.experimental.pallas import tpu as pltpu


def _mhd_kernel(x_ref, ctx_ref, wq_ref, wkv_ref, o_ref, *, scale, B, Lq, Lk, H):
    # Projections over the flattened batch: two MXU matmuls total.
    #   Q   = (B*Lq, D) @ (D, H)    (scaled by 1/sqrt(dk) right away)
    #   K|V = (B*Lk, D) @ (D, 2H)
    q = jnp.dot(x_ref[...], wq_ref[...],
                preferred_element_type=jnp.float32) * scale          # (B*Lq, H)
    kv = jnp.dot(ctx_ref[...], wkv_ref[...],
                 preferred_element_type=jnp.float32)                  # (B*Lk, 2H)

    # Hoisted column index (2-D iota; reused by every batch).
    col = lax.broadcasted_iota(jnp.int32, (Lq, Lk), 1)

    out_blocks = []
    # B is tiny and static -> fully unrolled; the scheduler sees everything.
    for b in range(B):
        qb = q[b * Lq:(b + 1) * Lq, :]       # (Lq, H), already * 1/sqrt(dk)
        kb = kv[b * Lk:(b + 1) * Lk, :H]     # (Lk, H)
        vb = kv[b * Lk:(b + 1) * Lk, H:]     # (Lk, H)

        # energy = Q @ K^T, contracting on H (no explicit transpose op).
        # Pre-scaling Q by a nonzero constant preserves the zero/nonzero
        # pattern, so the PyTorch 'length' heuristic below is unchanged,
        # and -inf masking is invariant under the later (implicit) scale.
        energy = lax.dot_general(
            qb, kb, dimension_numbers=(((1,), (1,)), ((), ())),
            preferred_element_type=jnp.float32)                       # (Lq, Lk)

        # PyTorch semantics: length = #nonzero entries in row 0 of energy,
        # then columns >= length are set to -inf for *all* query rows.
        # (Faithful to the original module, including its fragility if
        #  length == 0; zero-padded context rows give exactly-zero columns.)
        length = jnp.sum((energy[0:1, :] != 0.0).astype(jnp.int32))
        energy = jnp.where(col >= length, -jnp.inf, energy)

        # Numerically-stable softmax; the divide goes to the EUP via reciprocal.
        m = jnp.max(energy, axis=-1, keepdims=True)
        e = jnp.exp(energy - m)
        denom = jnp.sum(e, axis=-1, keepdims=True)
        score = e * pl.reciprocal(denom, approx=True)                 # (Lq, Lk)

        out_blocks.append(
            jnp.dot(score, vb, preferred_element_type=jnp.float32))   # (Lq, H)

    # One slab store of all batches instead of per-batch partial stores.
    o_ref[...] = jnp.concatenate(out_blocks, axis=0).astype(o_ref.dtype)


def multihead_dec(x, context, wq, wkv, dk):
    """x: (B, Lq, D), context: (B, Lk, D).
    wq:  (D, H)  == PyTorch Wq.weight.T
    wkv: (D, 2H) == concat([Wk.weight.T, Wv.weight.T], axis=1), fused at init.
    Returns (B, Lq, H) float32."""
    B, Lq, D = x.shape
    _, Lk, _ = context.shape
    H = wq.shape[1]
    scale = 1.0 / float(dk) ** 0.5

    # Free reshapes (contiguous): flatten the batch so the kernel runs one step.
    x_flat = x.reshape(B * Lq, D)
    ctx_flat = context.reshape(B * Lk, D)

    kernel = functools.partial(_mhd_kernel, scale=scale, B=B, Lq=Lq, Lk=Lk, H=H)
    out_flat = pl.pallas_call(
        kernel,
        out_shape=jax.ShapeDtypeStruct((B * Lq, H), jnp.float32),
        grid_spec=pltpu.PrefetchScalarGridSpec(
            num_scalar_prefetch=0,
            grid=(1,),  # single step: whole problem resident, no pipeline overhead
            in_specs=[
                pl.BlockSpec((B * Lq, D), lambda i: (0, 0)),    # x (flattened)
                pl.BlockSpec((B * Lk, D), lambda i: (0, 0)),    # context (flattened)
                pl.BlockSpec((D, H), lambda i: (0, 0)),         # Wq
                pl.BlockSpec((D, 2 * H), lambda i: (0, 0)),     # fused [Wk | Wv]
            ],
            out_specs=pl.BlockSpec((B * Lq, H), lambda i: (0, 0)),
        ),
        compiler_params=pltpu.CompilerParams(
            dimension_semantics=("arbitrary",)),
    )(x_flat, ctx_flat, wq, wkv)
    return out_flat.reshape(B, Lq, H)


def _reference(x, context, wq, wk, wv, dk):
    # Pure-JAX replica of the PyTorch forward (for a silent correctness check).
    q = x @ wq
    k = context @ wk
    v = context @ wv
    energy = jnp.einsum("bqh,bkh->bqk", q, k)
    length = jnp.sum(energy[:, 0, :] != 0.0, axis=-1)          # (B,)
    col = jnp.arange(energy.shape[-1])[None, None, :]
    energy = jnp.where(col >= length[:, None, None], -jnp.inf, energy)
    score = jax.nn.softmax(energy / (dk ** 0.5), axis=-1)
    return jnp.einsum("bqk,bkh->bqh", score, v)


if __name__ == "__main__":
    # Module hyperparameters (small, consistent with the forward pass).
    embedding_dim = 32
    dk = 8
    num_heads = 4
    H = dk * num_heads

    B, Lq, Lk = 2, 8, 8
    valid_len = 5  # pad the last Lk - valid_len context rows with zeros

    key = jax.random.PRNGKey(0)
    kx, kc, kq, kk, kv = jax.random.split(key, 5)

    x = jax.random.normal(kx, (B, Lq, embedding_dim), dtype=jnp.float32)
    context = jax.random.normal(kc, (B, Lk, embedding_dim), dtype=jnp.float32)
    # Zero-pad trailing context rows so the in-kernel length masking is exercised.
    pad_mask = (jnp.arange(Lk) < valid_len).astype(jnp.float32)[None, :, None]
    context = context * pad_mask

    # Deterministic "Linear" weights (stored as (D, H) == PyTorch weight.T).
    wq = jax.random.normal(kq, (embedding_dim, H), dtype=jnp.float32) * 0.1
    wk = jax.random.normal(kk, (embedding_dim, H), dtype=jnp.float32) * 0.1
    wv = jax.random.normal(kv, (embedding_dim, H), dtype=jnp.float32) * 0.1
    # Fused K|V parameter, prepared once at "init" time (not per forward call).
    wkv = jnp.concatenate([wk, wv], axis=1)                       # (D, 2H)

    out = multihead_dec(x, context, wq, wkv, dk)
    out = jax.block_until_ready(out)

    ref = _reference(x, context, wq, wk, wv, dk)
    assert out.shape == (B, Lq, H)
    # Tolerance accounts for the approximate (EUP) reciprocal in the softmax.
    np.testing.assert_allclose(np.asarray(out), np.asarray(ref),
                               rtol=2e-3, atol=2e-3)
    print("KERNEL_OK")
</pallas_src>

<mosaic_0001>
module attributes {stable_mosaic.version = 11 : i64} {
  func.func @_mhd_kernel(%arg0: i32, %arg1: memref<16x32xf32, #tpu.memory_space<vmem>>, %arg2: memref<16x32xf32, #tpu.memory_space<vmem>>, %arg3: memref<32x32xf32, #tpu.memory_space<vmem>>, %arg4: memref<32x64xf32, #tpu.memory_space<vmem>>, %arg5: memref<16x32xf32, #tpu.memory_space<vmem>>) attributes {dimension_semantics = [#tpu.dimension_semantics<arbitrary>], iteration_bounds = array<i64: 1>, scalar_prefetch = 0 : i64, scratch_operands = 0 : i64, tpu.core_type = #tpu.core_type<tc>, window_params = [{pipeline_mode = #tpu.pipeline_mode<synchronous>, transform_indices = @transform_0, window_bounds = array<i64: 16, 32>}, {pipeline_mode = #tpu.pipeline_mode<synchronous>, transform_indices = @transform_1, window_bounds = array<i64: 16, 32>}, {pipeline_mode = #tpu.pipeline_mode<synchronous>, transform_indices = @transform_2, window_bounds = array<i64: 32, 32>}, {pipeline_mode = #tpu.pipeline_mode<synchronous>, transform_indices = @transform_3, window_bounds = array<i64: 32, 64>}, {pipeline_mode = #tpu.pipeline_mode<synchronous>, transform_indices = @transform_4, window_bounds = array<i64: 16, 32>}]} {
    %c0 = arith.constant 0 : index
    %c0_0 = arith.constant 0 : index
    %0 = vector.load %arg1[%c0, %c0_0] : memref<16x32xf32, #tpu.memory_space<vmem>>, vector<16x32xf32>
    %c0_1 = arith.constant 0 : index
    %c0_2 = arith.constant 0 : index
    %1 = vector.load %arg3[%c0_1, %c0_2] : memref<32x32xf32, #tpu.memory_space<vmem>>, vector<32x32xf32>
    %cst = arith.constant dense<0.000000e+00> : vector<16x32xf32>
    %2 = tpu.matmul %0, %1, %cst {dimension_numbers = #tpu.dot_dimension_numbers<[1], [0], [0], [1], [0, 0, 1, 1], [], []>} : vector<16x32xf32>, vector<32x32xf32>, vector<16x32xf32> -> vector<16x32xf32>
    %cst_3 = arith.constant 0.353553385 : f32
    %3 = vector.broadcast %cst_3 : f32 to vector<16x32xf32>
    %4 = arith.mulf %2, %3 : vector<16x32xf32>
    %c0_4 = arith.constant 0 : index
    %c0_5 = arith.constant 0 : index
    %5 = vector.load %arg2[%c0_4, %c0_5] : memref<16x32xf32, #tpu.memory_space<vmem>>, vector<16x32xf32>
    %c0_6 = arith.constant 0 : index
    %c0_7 = arith.constant 0 : index
    %6 = vector.load %arg4[%c0_6, %c0_7] : memref<32x64xf32, #tpu.memory_space<vmem>>, vector<32x64xf32>
    %cst_8 = arith.constant dense<0.000000e+00> : vector<16x64xf32>
    %7 = tpu.matmul %5, %6, %cst_8 {dimension_numbers = #tpu.dot_dimension_numbers<[1], [0], [0], [1], [0, 0, 1, 1], [], []>} : vector<16x32xf32>, vector<32x64xf32>, vector<16x64xf32> -> vector<16x64xf32>
    %8 = tpu.iota {dimensions = array<i32: 1>} : vector<8x8xi32>
    %9 = vector.extract_strided_slice %4 {offsets = [0, 0], sizes = [8, 32], strides = [1, 1]} : vector<16x32xf32> to vector<8x32xf32>
    %10 = vector.extract_strided_slice %7 {offsets = [0, 0], sizes = [8, 32], strides = [1, 1]} : vector<16x64xf32> to vector<8x32xf32>
    %11 = vector.extract_strided_slice %7 {offsets = [0, 32], sizes = [8, 32], strides = [1, 1]} : vector<16x64xf32> to vector<8x32xf32>
    %cst_9 = arith.constant dense<0.000000e+00> : vector<8x8xf32>
    %12 = tpu.matmul %9, %10, %cst_9 {dimension_numbers = #tpu.dot_dimension_numbers<[1], [1], [0], [0], [0, 0, 1, 0], [], []>} : vector<8x32xf32>, vector<8x32xf32>, vector<8x8xf32> -> vector<8x8xf32>
    %13 = vector.extract_strided_slice %12 {offsets = [0, 0], sizes = [1, 8], strides = [1, 1]} : vector<8x8xf32> to vector<1x8xf32>
    %cst_10 = arith.constant 0.000000e+00 : f32
    %14 = vector.broadcast %cst_10 : f32 to vector<1x8xf32>
    %15 = arith.cmpf one, %13, %14 : vector<1x8xf32>
    %16 = arith.extui %15 : vector<1x8xi1> to vector<1x8xi32>
    %17 = vector.shape_cast %16 : vector<1x8xi32> to vector<1x1x8xi32>
    %cst_11 = arith.constant dense<0> : vector<1xi32>
    %18 = vector.multi_reduction <add>, %17, %cst_11 [1, 2] : vector<1x1x8xi32> to vector<1xi32>
    %19 = vector.shape_cast %18 : vector<1xi32> to vector<1x1x1xi32>
    %20 = vector.extract %19[0, 0, 0] : i32 from vector<1x1x1xi32>
    %21 = vector.broadcast %20 : i32 to vector<8x8xi32>
    %22 = arith.cmpi sge, %8, %21 : vector<8x8xi32>
    %cst_12 = arith.constant 0xFF800000 : f32
    %23 = vector.broadcast %cst_12 : f32 to vector<8x8xf32>
    %24 = arith.select %22, %23, %12 : vector<8x8xi1>, vector<8x8xf32>
    %cst_13 = arith.constant dense<0xFF800000> : vector<8xf32>
    %25 = vector.multi_reduction <maximumf>, %24, %cst_13 [1] : vector<8x8xf32> to vector<8xf32>
    %26 = vector.shape_cast %25 : vector<8xf32> to vector<8x1xf32>
    %27 = vector.broadcast %26 : vector<8x1xf32> to vector<8x8xf32>
    %28 = arith.subf %24, %27 : vector<8x8xf32>
    %29 = math.exp %28 : vector<8x8xf32>
    %cst_14 = arith.constant dense<0.000000e+00> : vector<8xf32>
    %30 = vector.multi_reduction <add>, %29, %cst_14 [1] : vector<8x8xf32> to vector<8xf32>
    %31 = vector.shape_cast %30 : vector<8xf32> to vector<8x1xf32>
    %32 = tpu.reciprocal %31 {approx = true} : vector<8x1xf32> -> vector<8x1xf32>
    %33 = vector.broadcast %32 : vector<8x1xf32> to vector<8x8xf32>
    %34 = arith.mulf %29, %33 : vector<8x8xf32>
    %cst_15 = arith.constant dense<0.000000e+00> : vector<8x32xf32>
    %35 = tpu.matmul %34, %11, %cst_15 {dimension_numbers = #tpu.dot_dimension_numbers<[1], [0], [0], [1], [0, 0, 1, 1], [], []>} : vector<8x8xf32>, vector<8x32xf32>, vector<8x32xf32> -> vector<8x32xf32>
    %36 = vector.extract_strided_slice %4 {offsets = [8, 0], sizes = [8, 32], strides = [1, 1]} : vector<16x32xf32> to vector<8x32xf32>
    %37 = vector.extract_strided_slice %7 {offsets = [8, 0], sizes = [8, 32], strides = [1, 1]} : vector<16x64xf32> to vector<8x32xf32>
    %38 = vector.extract_strided_slice %7 {offsets = [8, 32], sizes = [8, 32], strides = [1, 1]} : vector<16x64xf32> to vector<8x32xf32>
    %cst_16 = arith.constant dense<0.000000e+00> : vector<8x8xf32>
    %39 = tpu.matmul %36, %37, %cst_16 {dimension_numbers = #tpu.dot_dimension_numbers<[1], [1], [0], [0], [0, 0, 1, 0], [], []>} : vector<8x32xf32>, vector<8x32xf32>, vector<8x8xf32> -> vector<8x8xf32>
    %40 = vector.extract_strided_slice %39 {offsets = [0, 0], sizes = [1, 8], strides = [1, 1]} : vector<8x8xf32> to vector<1x8xf32>
    %cst_17 = arith.constant 0.000000e+00 : f32
    %41 = vector.broadcast %cst_17 : f32 to vector<1x8xf32>
    %42 = arith.cmpf one, %40, %41 : vector<1x8xf32>
    %43 = arith.extui %42 : vector<1x8xi1> to vector<1x8xi32>
    %44 = vector.shape_cast %43 : vector<1x8xi32> to vector<1x1x8xi32>
    %cst_18 = arith.constant dense<0> : vector<1xi32>
    %45 = vector.multi_reduction <add>, %44, %cst_18 [1, 2] : vector<1x1x8xi32> to vector<1xi32>
    %46 = vector.shape_cast %45 : vector<1xi32> to vector<1x1x1xi32>
    %47 = vector.extract %46[0, 0, 0] : i32 from vector<1x1x1xi32>
    %48 = vector.broadcast %47 : i32 to vector<8x8xi32>
    %49 = arith.cmpi sge, %8, %48 : vector<8x8xi32>
    %cst_19 = arith.constant 0xFF800000 : f32
    %50 = vector.broadcast %cst_19 : f32 to vector<8x8xf32>
    %51 = arith.select %49, %50, %39 : vector<8x8xi1>, vector<8x8xf32>
    %cst_20 = arith.constant dense<0xFF800000> : vector<8xf32>
    %52 = vector.multi_reduction <maximumf>, %51, %cst_20 [1] : vector<8x8xf32> to vector<8xf32>
    %53 = vector.shape_cast %52 : vector<8xf32> to vector<8x1xf32>
    %54 = vector.broadcast %53 : vector<8x1xf32> to vector<8x8xf32>
    %55 = arith.subf %51, %54 : vector<8x8xf32>
    %56 = math.exp %55 : vector<8x8xf32>
    %cst_21 = arith.constant dense<0.000000e+00> : vector<8xf32>
    %57 = vector.multi_reduction <add>, %56, %cst_21 [1] : vector<8x8xf32> to vector<8xf32>
    %58 = vector.shape_cast %57 : vector<8xf32> to vector<8x1xf32>
    %59 = tpu.reciprocal %58 {approx = true} : vector<8x1xf32> -> vector<8x1xf32>
    %60 = vector.broadcast %59 : vector<8x1xf32> to vector<8x8xf32>
    %61 = arith.mulf %56, %60 : vector<8x8xf32>
    %cst_22 = arith.constant dense<0.000000e+00> : vector<8x32xf32>
    %62 = tpu.matmul %61, %38, %cst_22 {dimension_numbers = #tpu.dot_dimension_numbers<[1], [0], [0], [1], [0, 0, 1, 1], [], []>} : vector<8x8xf32>, vector<8x32xf32>, vector<8x32xf32> -> vector<8x32xf32>
    %63 = tpu.concatenate %35, %62 in 0 : vector<8x32xf32>, vector<8x32xf32> -> vector<16x32xf32>
    %c0_23 = arith.constant 0 : index
    %c0_24 = arith.constant 0 : index
    %64 = vector.load %arg5[%c0_23, %c0_24] : memref<16x32xf32, #tpu.memory_space<vmem>>, vector<16x32xf32>
    tpu.vector_store %arg5[%c0_23, %c0_24], %63 {strides = array<i32>} : memref<16x32xf32, #tpu.memory_space<vmem>>, vector<16x32xf32>,
    return
  }
  func.func @transform_0(%arg0: i32) -> (i32, i32) {
    %c0_i32 = arith.constant 0 : i32
    %c0_i32_0 = arith.constant 0 : i32
    %c0_i32_1 = arith.constant 0 : i32
    return %c0_i32, %c0_i32_0 : i32, i32
  }
  func.func @transform_1(%arg0: i32) -> (i32, i32) {
    %c0_i32 = arith.constant 0 : i32
    %c0_i32_0 = arith.constant 0 : i32
    %c0_i32_1 = arith.constant 0 : i32
    return %c0_i32, %c0_i32_0 : i32, i32
  }
  func.func @transform_2(%arg0: i32) -> (i32, i32) {
    %c0_i32 = arith.constant 0 : i32
    %c0_i32_0 = arith.constant 0 : i32
    %c0_i32_1 = arith.constant 0 : i32
    return %c0_i32, %c0_i32_0 : i32, i32
  }
  func.func @transform_3(%arg0: i32) -> (i32, i32) {
    %c0_i32 = arith.constant 0 : i32
    %c0_i32_0 = arith.constant 0 : i32
    %c0_i32_1 = arith.constant 0 : i32
    return %c0_i32, %c0_i32_0 : i32, i32
  }
  func.func @transform_4(%arg0: i32) -> (i32, i32) {
    %c0_i32 = arith.constant 0 : i32
    %c0_i32_0 = arith.constant 0 : i32
    %c0_i32_1 = arith.constant 0 : i32
    return %c0_i32, %c0_i32_0 : i32, i32
  }
}

</mosaic_0001>

<llo_original>
// kernel: tpu_custom_call.1
$region0: #{tpu_custom_call.1}
  #allocation0 [shape = 'u32[]', space=smem, size = 0x4, offset = 0x4, fixed_abs, tag = 'smem constant byte address 0x4 - core index']
  #allocation1 [shape = 'u32[144,128]{1,0:T(1,128)}', space=vmem, size = 0x12000, scoped, tag = 'internal scratch']
  %s0 = inlined_call_operand.hbm [shape: f32[16,32], index: 0, kind: input, shape index: {}]
  %s1 = inlined_call_operand.hbm [shape: f32[16,32], index: 1, kind: input, shape index: {}]
  %s2 = inlined_call_operand.hbm [shape: f32[32,32], index: 2, kind: input, shape index: {}]
  %s3 = inlined_call_operand.hbm [shape: f32[32,64], index: 3, kind: input, shape index: {}]
  %s4 = inlined_call_operand.hbm [shape: f32[16,32], index: 4, kind: output, shape index: {}]
  %s5 = sld [smem:[#allocation0]]
  $region42: #{tpu_custom_call.1} parent=0
    _
  %s7 = ssub.s32 1, %s5
  %s8 = scalar_select 0, %s7, %s5
  $region1: #{tpu_custom_call.1} parent=0
    #allocation2 [shape = 'u8[8192]{0}', space=vmem, size = 0x2000, scoped, tag = 'input window, operand 0, single buffered']
    #allocation3 [shape = 's32[1]{0}', space=sflag, size = 0x4, scoped, tag = 'scoped memory for tpu_custom_call.1']
    #allocation4 [shape = 's32[1]{0}', space=sflag, size = 0x4, scoped, tag = 'scoped memory for tpu_custom_call.1']
    #allocation5 [shape = 'u8[8192]{0}', space=vmem, size = 0x2000, scoped, tag = 'input window, operand 1, single buffered']
    #allocation6 [shape = 's32[1]{0}', space=sflag, size = 0x4, scoped, tag = 'scoped memory for tpu_custom_call.1']
    #allocation7 [shape = 'u8[16384]{0}', space=vmem, size = 0x4000, scoped, tag = 'input window, operand 2, single buffered']
    #allocation8 [shape = 'u8[16384]{0}', space=vmem, size = 0x4000, scoped, tag = 'input window, operand 3, single buffered']
    #allocation9 [shape = 's32[1]{0}', space=sflag, size = 0x4, scoped, tag = 'scoped memory for tpu_custom_call.1']
    #allocation10 [shape = 'u8[8192]{0}', space=vmem, size = 0x2000, scoped, tag = 'output window, operand 0, single buffered']
    %9 = vsyncpa [#allocation3], 0
    %10 = vsyncpa [#allocation6], 0
    %11 = vsyncpa [#allocation9], 0
    %12 = vsyncpa [#allocation4], 0
    // Predicated region
    $region2: #{tpu_custom_call.1} parent=1 // pred_check
      _
    $region3: #{tpu_custom_call.1} parent=1 // pred_check_branch
      %14 = sbr.rel (0) target = $region5
    $region4: #{tpu_custom_call.1} parent=1 // pred_region
      %s16 = ssub.s32 256, 256
      %17 = vsyncadd [#allocation3], %s16
      %s18 = sshll.u32 [#allocation2], 4
      %s19 = int_to_ptr.vmem [resolvable:$true] %s18
      %24 = dma.hbm_to_vmem [thread:$0]  %s0, 256, %s19, [#allocation3], 128, 128, 8
    $region5: #{tpu_custom_call.1} parent=1 // pred_fallthru
      _
    // Predicated region
    $region6: #{tpu_custom_call.1} parent=1 // pred_check
      _
    $region7: #{tpu_custom_call.1} parent=1 // pred_check_branch
      %26 = sbr.rel (0) target = $region9
    $region8: #{tpu_custom_call.1} parent=1 // pred_region
      %s28 = ssub.s32 256, 256
      %29 = vsyncadd [#allocation6], %s28
      %s30 = sshll.u32 [#allocation5], 4
      %s31 = int_to_ptr.vmem [resolvable:$true] %s30
      %36 = dma.hbm_to_vmem [thread:$0]  %s1, 256, %s31, [#allocation6], 128, 128, 8
    $region9: #{tpu_custom_call.1} parent=1 // pred_fallthru
      _
    // Predicated region
    $region10: #{tpu_custom_call.1} parent=1 // pred_check
      _
    $region11: #{tpu_custom_call.1} parent=1 // pred_check_branch
      %38 = sbr.rel (0) target = $region13
    $region12: #{tpu_custom_call.1} parent=1 // pred_region
      %s40 = ssub.s32 512, 512
      %41 = vsyncadd [#allocation6], %s40
      %s42 = sshll.u32 [#allocation7], 4
      %s43 = int_to_ptr.vmem [resolvable:$true] %s42
      %48 = dma.hbm_to_vmem [thread:$0]  %s2, 512, %s43, [#allocation6], 128, 128, 8
    $region13: #{tpu_custom_call.1} parent=1 // pred_fallthru
      _
    // Predicated region
    $region14: #{tpu_custom_call.1} parent=1 // pred_check
      _
    $region15: #{tpu_custom_call.1} parent=1 // pred_check_branch
      %50 = sbr.rel (0) target = $region17
    $region16: #{tpu_custom_call.1} parent=1 // pred_region
      %s52 = ssub.s32 512, 512
      %53 = vsyncadd [#allocation9], %s52
      %s54 = sshll.u32 [#allocation8], 4
      %s55 = int_to_ptr.vmem [resolvable:$true] %s54
      %60 = dma.hbm_to_vmem [thread:$0]  %s3, 512, %s55, [#allocation9], 128, 128, 8
    $region17: #{tpu_custom_call.1} parent=1 // pred_fallthru
      _
    // Predicated region
    $region18: #{tpu_custom_call.1} parent=1 // pred_check
      _
    $region19: #{tpu_custom_call.1} parent=1 // pred_check_branch
      %62 = sbr.rel (0) target = $region21
    $region20: #{tpu_custom_call.1} parent=1 // pred_region
      %63 = dma.done [#allocation3], 256
    $region21: #{tpu_custom_call.1} parent=1 // pred_fallthru
      _
    // Predicated region
    $region22: #{tpu_custom_call.1} parent=1 // pred_check
      _
    $region23: #{tpu_custom_call.1} parent=1 // pred_check_branch
      %65 = sbr.rel (0) target = $region25
    $region24: #{tpu_custom_call.1} parent=1 // pred_region
      %66 = dma.done [#allocation6], 256
    $region25: #{tpu_custom_call.1} parent=1 // pred_fallthru
      _
    // Predicated region
    $region26: #{tpu_custom_call.1} parent=1 // pred_check
      _
    $region27: #{tpu_custom_call.1} parent=1 // pred_check_branch
      %68 = sbr.rel (0) target = $region29
    $region28: #{tpu_custom_call.1} parent=1 // pred_region
      %69 = dma.done [#allocation6], 512
    $region29: #{tpu_custom_call.1} parent=1 // pred_fallthru
      _
    // Predicated region
    $region30: #{tpu_custom_call.1} parent=1 // pred_check
      _
    $region31: #{tpu_custom_call.1} parent=1 // pred_check_branch
      %71 = sbr.rel (0) target = $region33
    $region32: #{tpu_custom_call.1} parent=1 // pred_region
      %72 = dma.done [#allocation9], 512
    $region33: #{tpu_custom_call.1} parent=1 // pred_fallthru
      _
    %v73 = vld [vmem:[#allocation2] sm:$0xff]
    %v74 = vld [vmem:[#allocation2 + $0x8] sm:$0xff]
    %v75 = vld [vmem:[#allocation7] sm:$0xff]
    %v76 = vld [vmem:[#allocation7 + $0x8] sm:$0xff]
    %v77 = vld [vmem:[#allocation7 + $0x10] sm:$0xff]
    %v78 = vld [vmem:[#allocation7 + $0x18] sm:$0xff]
    %vm79 = vcmask 261120
    %v81 = vsel %vm79, %v73, 0
    %v84 = vsel %vm79, %v74, 0
    %86 = vmatprep.subr.mxu0 0.0
    %87 = vmatpush1.msra.mxu0 0.0
    %88 = vmatprep.subr.mxu0 0.0
    %89 = vmatpush1.msra.mxu0 0.0
    %90 = vmatprep.subr.mxu0 0.0
    %91 = vmatpush1.msra.mxu0 0.0
    %92 = vmatprep.subr.mxu0 0.0
    %93 = vmatpush1.msra.mxu0 0.0
    %94 = vmatprep.subr.mxu0 0.0
    %95 = vmatpush1.msra.mxu0 0.0
    %96 = vmatprep.subr.mxu0 0.0
    %97 = vmatpush1.msra.mxu0 0.0
    %98 = vmatprep.subr.mxu0 0.0
    %99 = vmatpush1.msra.mxu0 0.0
    %100 = vmatprep.subr.mxu0 0.0
    %101 = vmatpush1.msra.mxu0 0.0
    %102 = vmatprep.subr.mxu0 0.0
    %103 = vmatpush1.msra.mxu0 0.0
    %104 = vmatprep.subr.mxu0 0.0
    %105 = vmatpush1.msra.mxu0 0.0
    %106 = vmatprep.subr.mxu0 0.0
    %107 = vmatpush1.msra.mxu0 0.0
    %108 = vmatprep.subr.mxu0 0.0
    %109 = vmatpush1.msra.mxu0 0.0
    %110 = vmatprep.subr.mxu0 0.0
    %111 = vmatpush1.msra.mxu0 %v78
    %112 = vmatprep.subr.mxu0 0.0
    %113 = vmatpush1.msra.mxu0 %v77
    %114 = vmatprep.subr.mxu0 0.0
    %115 = vmatpush1.msra.mxu0 %v76
    %116 = vmatprep.subr.mxu0 0.0
    %117 = vmatpush1.msra.mxu0 %v75
    %118 = vmatprep.subr.mxu0 0.0
    %119 = vmatpush2.msra.mxu0 0.0
    %120 = vmatprep.subr.mxu0 0.0
    %121 = vmatpush2.msra.mxu0 0.0
    %122 = vmatprep.subr.mxu0 0.0
    %123 = vmatpush2.msra.mxu0 0.0
    %124 = vmatprep.subr.mxu0 0.0
    %125 = vmatpush2.msra.mxu0 0.0
    %126 = vmatprep.subr.mxu0 0.0
    %127 = vmatpush2.msra.mxu0 0.0
    %128 = vmatprep.subr.mxu0 0.0
    %129 = vmatpush2.msra.mxu0 0.0
    %130 = vmatprep.subr.mxu0 0.0
    %131 = vmatpush2.msra.mxu0 0.0
    %132 = vmatprep.subr.mxu0 0.0
    %133 = vmatpush2.msra.mxu0 0.0
    %134 = vmatprep.subr.mxu0 0.0
    %135 = vmatpush2.msra.mxu0 0.0
    %136 = vmatprep.subr.mxu0 0.0
    %137 = vmatpush2.msra.mxu0 0.0
    %138 = vmatprep.subr.mxu0 0.0
    %139 = vmatpush2.msra.mxu0 0.0
    %140 = vmatprep.subr.mxu0 0.0
    %141 = vmatpush2.msra.mxu0 0.0
    %142 = vmatprep.subr.mxu0 0.0
    %143 = vmatpush2.msra.mxu0 0.0
    %144 = vmatprep.subr.mxu0 0.0
    %145 = vmatpush2.msra.mxu0 0.0
    %146 = vmatprep.subr.mxu0 0.0
    %147 = vmatpush2.msra.mxu0 0.0
    %148 = vmatprep.subr.mxu0 0.0
    %149 = vmatpush2.msra.mxu0 0.0
    %150 = vmatprep.mubr.f32.mxu0 0.0
    %151 = vmatmul.mubr.f32.gmra.mxu0 %v81
    %v152 = vpop.f32.mrf.mxu0
    %v153 = vadd.f32 0.0, %v152
    %v154 = vpop.f32.mrf.mxu0
    %155 = vmatprep.mubr.f32.mxu0 0.0
    %156 = vmatmul.mubr.f32.gmra.mxu0 %v84
    %v157 = vpop.f32.mrf.mxu0
    %v158 = vadd.f32 0.0, %v157
    %v159 = vpop.f32.mrf.mxu0
    %160 = vdwg.mxu0
    %v161 = vmul.f32 %v153, 0.35355338
    %v162 = vmul.f32 %v158, 0.35355338
    %v163 = vld [vmem:[#allocation5] sm:$0xff]
    %v164 = vld [vmem:[#allocation5 + $0x8] sm:$0xff]
    %v165 = vld [vmem:[#allocation8] sm:$0xff]
    %v166 = vld [vmem:[#allocation8 + $0x8] sm:$0xff]
    %v167 = vld [vmem:[#allocation8 + $0x10] sm:$0xff]
    %v168 = vld [vmem:[#allocation8 + $0x18] sm:$0xff]
    %v170 = vsel %vm79, %v163, 0
    %v173 = vsel %vm79, %v164, 0
    %175 = vmatprep.subr.mxu0 0.0
    %176 = vmatpush1.msra.mxu0 0.0
    %177 = vmatprep.subr.mxu0 0.0
    %178 = vmatpush1.msra.mxu0 0.0
    %179 = vmatprep.subr.mxu0 0.0
    %180 = vmatpush1.msra.mxu0 0.0
    %181 = vmatprep.subr.mxu0 0.0
    %182 = vmatpush1.msra.mxu0 0.0
    %183 = vmatprep.subr.mxu0 0.0
    %184 = vmatpush1.msra.mxu0 0.0
    %185 = vmatprep.subr.mxu0 0.0
    %186 = vmatpush1.msra.mxu0 0.0
    %187 = vmatprep.subr.mxu0 0.0
    %188 = vmatpush1.msra.mxu0 0.0
    %189 = vmatprep.subr.mxu0 0.0
    %190 = vmatpush1.msra.mxu0 0.0
    %191 = vmatprep.subr.mxu0 0.0
    %192 = vmatpush1.msra.mxu0 0.0
    %193 = vmatprep.subr.mxu0 0.0
    %194 = vmatpush1.msra.mxu0 0.0
    %195 = vmatprep.subr.mxu0 0.0
    %196 = vmatpush1.msra.mxu0 0.0
    %197 = vmatprep.subr.mxu0 0.0
    %198 = vmatpush1.msra.mxu0 0.0
    %199 = vmatprep.subr.mxu0 0.0
    %200 = vmatpush1.msra.mxu0 %v168
    %201 = vmatprep.subr.mxu0 0.0
    %202 = vmatpush1.msra.mxu0 %v167
    %203 = vmatprep.subr.mxu0 0.0
    %204 = vmatpush1.msra.mxu0 %v166
    %205 = vmatprep.subr.mxu0 0.0
    %206 = vmatpush1.msra.mxu0 %v165
    %207 = vmatprep.subr.mxu0 0.0
    %208 = vmatpush2.msra.mxu0 0.0
    %209 = vmatprep.subr.mxu0 0.0
    %210 = vmatpush2.msra.mxu0 0.0
    %211 = vmatprep.subr.mxu0 0.0
    %212 = vmatpush2.msra.mxu0 0.0
    %213 = vmatprep.subr.mxu0 0.0
    %214 = vmatpush2.msra.mxu0 0.0
    %215 = vmatprep.subr.mxu0 0.0
    %216 = vmatpush2.msra.mxu0 0.0
    %217 = vmatprep.subr.mxu0 0.0
    %218 = vmatpush2.msra.mxu0 0.0
    %219 = vmatprep.subr.mxu0 0.0
    %220 = vmatpush2.msra.mxu0 0.0
    %221 = vmatprep.subr.mxu0 0.0
    %222 = vmatpush2.msra.mxu0 0.0
    %223 = vmatprep.subr.mxu0 0.0
    %224 = vmatpush2.msra.mxu0 0.0
    %225 = vmatprep.subr.mxu0 0.0
    %226 = vmatpush2.msra.mxu0 0.0
    %227 = vmatprep.subr.mxu0 0.0
    %228 = vmatpush2.msra.mxu0 0.0
    %229 = vmatprep.subr.mxu0 0.0
    %230 = vmatpush2.msra.mxu0 0.0
    %231 = vmatprep.subr.mxu0 0.0
    %232 = vmatpush2.msra.mxu0 0.0
    %233 = vmatprep.subr.mxu0 0.0
    %234 = vmatpush2.msra.mxu0 0.0
    %235 = vmatprep.subr.mxu0 0.0
    %236 = vmatpush2.msra.mxu0 0.0
    %237 = vmatprep.subr.mxu0 0.0
    %238 = vmatpush2.msra.mxu0 0.0
    %239 = vmatprep.mubr.f32.mxu0 0.0
    %240 = vmatmul.mubr.f32.gmra.mxu0 %v170
    %v241 = vpop.f32.mrf.mxu0
    %v242 = vadd.f32 0.0, %v241
    %v243 = vpop.f32.mrf.mxu0
    %244 = vmatprep.mubr.f32.mxu0 0.0
    %245 = vmatmul.mubr.f32.gmra.mxu0 %v173
    %v246 = vpop.f32.mrf.mxu0
    %v247 = vadd.f32 0.0, %v246
    %v248 = vpop.f32.mrf.mxu0
    %249 = vdwg.mxu0
    %v250 = vlaneseq
    %v251 = vand.u32 %v250, 127
    %v253 = vsel %vm79, %v161, 0
    %v256 = vsel %vm79, %v242, 0
    %258 = vmatprep.subr.mxu0 0.0
    %259 = vmatpush1.xpose.msra.mxu0 0.0
    %260 = vmatprep.subr.mxu0 0.0
    %261 = vmatpush1.xpose.msra.mxu0 0.0
    %262 = vmatprep.subr.mxu0 0.0
    %263 = vmatpush1.xpose.msra.mxu0 0.0
    %264 = vmatprep.subr.mxu0 0.0
    %265 = vmatpush1.xpose.msra.mxu0 0.0
    %266 = vmatprep.subr.mxu0 0.0
    %267 = vmatpush1.xpose.msra.mxu0 0.0
    %268 = vmatprep.subr.mxu0 0.0
    %269 = vmatpush1.xpose.msra.mxu0 0.0
    %270 = vmatprep.subr.mxu0 0.0
    %271 = vmatpush1.xpose.msra.mxu0 0.0
    %272 = vmatprep.subr.mxu0 0.0
    %273 = vmatpush1.xpose.msra.mxu0 0.0
    %274 = vmatprep.subr.mxu0 0.0
    %275 = vmatpush1.xpose.msra.mxu0 0.0
    %276 = vmatprep.subr.mxu0 0.0
    %277 = vmatpush1.xpose.msra.mxu0 0.0
    %278 = vmatprep.subr.mxu0 0.0
    %279 = vmatpush1.xpose.msra.mxu0 0.0
    %280 = vmatprep.subr.mxu0 0.0
    %281 = vmatpush1.xpose.msra.mxu0 0.0
    %282 = vmatprep.subr.mxu0 0.0
    %283 = vmatpush1.xpose.msra.mxu0 0.0
    %284 = vmatprep.subr.mxu0 0.0
    %285 = vmatpush1.xpose.msra.mxu0 0.0
    %286 = vmatprep.subr.mxu0 0.0
    %287 = vmatpush1.xpose.msra.mxu0 0.0
    %288 = vmatprep.subr.mxu0 0.0
    %289 = vmatpush1.xpose.msra.mxu0 %v256
    %290 = vmatprep.subr.mxu0 0.0
    %291 = vmatpush2.xpose.msra.mxu0 0.0
    %292 = vmatprep.subr.mxu0 0.0
    %293 = vmatpush2.xpose.msra.mxu0 0.0
    %294 = vmatprep.subr.mxu0 0.0
    %295 = vmatpush2.xpose.msra.mxu0 0.0
    %296 = vmatprep.subr.mxu0 0.0
    %297 = vmatpush2.xpose.msra.mxu0 0.0
    %298 = vmatprep.subr.mxu0 0.0
    %299 = vmatpush2.xpose.msra.mxu0 0.0
    %300 = vmatprep.subr.mxu0 0.0
    %301 = vmatpush2.xpose.msra.mxu0 0.0
    %302 = vmatprep.subr.mxu0 0.0
    %303 = vmatpush2.xpose.msra.mxu0 0.0
    %304 = vmatprep.subr.mxu0 0.0
    %305 = vmatpush2.xpose.msra.mxu0 0.0
    %306 = vmatprep.subr.mxu0 0.0
    %307 = vmatpush2.xpose.msra.mxu0 0.0
    %308 = vmatprep.subr.mxu0 0.0
    %309 = vmatpush2.xpose.msra.mxu0 0.0
    %310 = vmatprep.subr.mxu0 0.0
    %311 = vmatpush2.xpose.msra.mxu0 0.0
    %312 = vmatprep.subr.mxu0 0.0
    %313 = vmatpush2.xpose.msra.mxu0 0.0
    %314 = vmatprep.subr.mxu0 0.0
    %315 = vmatpush2.xpose.msra.mxu0 0.0
    %316 = vmatprep.subr.mxu0 0.0
    %317 = vmatpush2.xpose.msra.mxu0 0.0
    %318 = vmatprep.subr.mxu0 0.0
    %319 = vmatpush2.xpose.msra.mxu0 0.0
    %320 = vmatprep.subr.mxu0 0.0
    %321 = vmatpush2.xpose.msra.mxu0 0.0
    %322 = vmatprep.mubr.f32.mxu0 0.0
    %323 = vmatmul.mubr.f32.gmra.mxu0 %v253
    %v324 = vpop.f32.mrf.mxu0
    %v325 = vadd.f32 0.0, %v324
    %v326 = vpop.f32.mrf.mxu0
    %327 = vdwg.mxu0
    %vm328 = vcmp.ne.f32.partialorder %v325, 0.0
    %v329 = vsel %vm328, 1, 0
    %vm330 = vcmask 57344
    %v331 = vsel %vm330, %v329, 0
    %v332 = vand.u32 %v331, 65535
    %v333 = vshrl.u32 %v331, 16
    %v334 = vcvt.s32.f32 %v332
    %v335 = vcvt.s32.f32 %v333
    %336 = vadd.xlane.f32.xlu0 %v334
    %v337 = vpop.xlane.xlu0 %336
    %338 = vadd.xlane.f32.xlu0 %v335
    %v339 = vpop.xlane.xlu0 %338
    %v340 = vcvt.f32.s32 %v337
    %v341 = vcvt.f32.s32 %v339
    %v342 = vshll.u32 %v341, 16
    %v343 = vadd.s32 %v342, %v340
    %v344 = vrot.slane %v343, 4
    %v345 = vadd.s32 %v343, %v344
    %v346 = vrot.slane %v345, 2
    %v347 = vadd.s32 %v345, %v346
    %v348 = vrot.slane %v347, 1
    %v349 = vadd.s32 %v347, %v348
    %s350 = vtos %v349
    %v351 = vstv %s350
    %vm352 = vcmp.ge.s32.totalorder %v251, %v351
    %v353 = vsel %vm352, -inf, %v325
    %vm354 = vcmask 64512
    %v355 = vsel %vm354, %v353, -inf
    %356 = vmax.xlane.f32.xlu0 %v355
    %v357 = vpop.xlane.xlu0 %356
    %v358 = vsub.f32 %v353, %v357
    %v359 = vmul.f32 %v358, 1.442695
    %v360 = vpow.pop %v359
    %v361 = vsel %vm354, %v360, 0.0
    %362 = vadd.xlane.f32.xlu0 %v361
    %v363 = vpop.xlane.xlu0 %362
    %v364 = vrcp.pop %v363
    %v365 = vmul.f32 %v360, %v364
    %366 = vrot.lane.b32.xlu0 %v242, 96
    %v367 = vpop.permute.xlu0 %366
    %v370 = vsel %vm354, %v365, 0
    %372 = vmatprep.subr.mxu0 0.0
    %373 = vmatpush1.msra.mxu0 0.0
    %374 = vmatprep.subr.mxu0 0.0
    %375 = vmatpush1.msra.mxu0 0.0
    %376 = vmatprep.subr.mxu0 0.0
    %377 = vmatpush1.msra.mxu0 0.0
    %378 = vmatprep.subr.mxu0 0.0
    %379 = vmatpush1.msra.mxu0 0.0
    %380 = vmatprep.subr.mxu0 0.0
    %381 = vmatpush1.msra.mxu0 0.0
    %382 = vmatprep.subr.mxu0 0.0
    %383 = vmatpush1.msra.mxu0 0.0
    %384 = vmatprep.subr.mxu0 0.0
    %385 = vmatpush1.msra.mxu0 0.0
    %386 = vmatprep.subr.mxu0 0.0
    %387 = vmatpush1.msra.mxu0 0.0
    %388 = vmatprep.subr.mxu0 0.0
    %389 = vmatpush1.msra.mxu0 0.0
    %390 = vmatprep.subr.mxu0 0.0
    %391 = vmatpush1.msra.mxu0 0.0
    %392 = vmatprep.subr.mxu0 0.0
    %393 = vmatpush1.msra.mxu0 0.0
    %394 = vmatprep.subr.mxu0 0.0
    %395 = vmatpush1.msra.mxu0 0.0
    %396 = vmatprep.subr.mxu0 0.0
    %397 = vmatpush1.msra.mxu0 0.0
    %398 = vmatprep.subr.mxu0 0.0
    %399 = vmatpush1.msra.mxu0 0.0
    %400 = vmatprep.subr.mxu0 0.0
    %401 = vmatpush1.msra.mxu0 0.0
    %402 = vmatprep.subr.mxu0 0.0
    %403 = vmatpush1.msra.mxu0 %v367
    %404 = vmatprep.subr.mxu0 0.0
    %405 = vmatpush2.msra.mxu0 0.0
    %406 = vmatprep.subr.mxu0 0.0
    %407 = vmatpush2.msra.mxu0 0.0
    %408 = vmatprep.subr.mxu0 0.0
    %409 = vmatpush2.msra.mxu0 0.0
    %410 = vmatprep.subr.mxu0 0.0
    %411 = vmatpush2.msra.mxu0 0.0
    %412 = vmatprep.subr.mxu0 0.0
    %413 = vmatpush2.msra.mxu0 0.0
    %414 = vmatprep.subr.mxu0 0.0
    %415 = vmatpush2.msra.mxu0 0.0
    %416 = vmatprep.subr.mxu0 0.0
    %417 = vmatpush2.msra.mxu0 0.0
    %418 = vmatprep.subr.mxu0 0.0
    %419 = vmatpush2.msra.mxu0 0.0
    %420 = vmatprep.subr.mxu0 0.0
    %421 = vmatpush2.msra.mxu0 0.0
    %422 = vmatprep.subr.mxu0 0.0
    %423 = vmatpush2.msra.mxu0 0.0
    %424 = vmatprep.subr.mxu0 0.0
    %425 = vmatpush2.msra.mxu0 0.0
    %426 = vmatprep.subr.mxu0 0.0
    %427 = vmatpush2.msra.mxu0 0.0
    %428 = vmatprep.subr.mxu0 0.0
    %429 = vmatpush2.msra.mxu0 0.0
    %430 = vmatprep.subr.mxu0 0.0
    %431 = vmatpush2.msra.mxu0 0.0
    %432 = vmatprep.subr.mxu0 0.0
    %433 = vmatpush2.msra.mxu0 0.0
    %434 = vmatprep.subr.mxu0 0.0
    %435 = vmatpush2.msra.mxu0 0.0
    %436 = vmatprep.mubr.f32.mxu0 0.0
    %437 = vmatmul.mubr.f32.gmra.mxu0 %v370
    %v438 = vpop.f32.mrf.mxu0
    %v439 = vadd.f32 0.0, %v438
    %v440 = vpop.f32.mrf.mxu0
    %441 = vdwg.mxu0
    %v443 = vsel %vm79, %v162, 0
    %v446 = vsel %vm79, %v247, 0
    %448 = vmatprep.subr.mxu0 0.0
    %449 = vmatpush1.xpose.msra.mxu0 0.0
    %450 = vmatprep.subr.mxu0 0.0
    %451 = vmatpush1.xpose.msra.mxu0 0.0
    %452 = vmatprep.subr.mxu0 0.0
    %453 = vmatpush1.xpose.msra.mxu0 0.0
    %454 = vmatprep.subr.mxu0 0.0
    %455 = vmatpush1.xpose.msra.mxu0 0.0
    %456 = vmatprep.subr.mxu0 0.0
    %457 = vmatpush1.xpose.msra.mxu0 0.0
    %458 = vmatprep.subr.mxu0 0.0
    %459 = vmatpush1.xpose.msra.mxu0 0.0
    %460 = vmatprep.subr.mxu0 0.0
    %461 = vmatpush1.xpose.msra.mxu0 0.0
    %462 = vmatprep.subr.mxu0 0.0
    %463 = vmatpush1.xpose.msra.mxu0 0.0
    %464 = vmatprep.subr.mxu0 0.0
    %465 = vmatpush1.xpose.msra.mxu0 0.0
    %466 = vmatprep.subr.mxu0 0.0
    %467 = vmatpush1.xpose.msra.mxu0 0.0
    %468 = vmatprep.subr.mxu0 0.0
    %469 = vmatpush1.xpose.msra.mxu0 0.0
    %470 = vmatprep.subr.mxu0 0.0
    %471 = vmatpush1.xpose.msra.mxu0 0.0
    %472 = vmatprep.subr.mxu0 0.0
    %473 = vmatpush1.xpose.msra.mxu0 0.0
    %474 = vmatprep.subr.mxu0 0.0
    %475 = vmatpush1.xpose.msra.mxu0 0.0
    %476 = vmatprep.subr.mxu0 0.0
    %477 = vmatpush1.xpose.msra.mxu0 0.0
    %478 = vmatprep.subr.mxu0 0.0
    %479 = vmatpush1.xpose.msra.mxu0 %v446
    %480 = vmatprep.subr.mxu0 0.0
    %481 = vmatpush2.xpose.msra.mxu0 0.0
    %482 = vmatprep.subr.mxu0 0.0
    %483 = vmatpush2.xpose.msra.mxu0 0.0
    %484 = vmatprep.subr.mxu0 0.0
    %485 = vmatpush2.xpose.msra.mxu0 0.0
    %486 = vmatprep.subr.mxu0 0.0
    %487 = vmatpush2.xpose.msra.mxu0 0.0
    %488 = vmatprep.subr.mxu0 0.0
    %489 = vmatpush2.xpose.msra.mxu0 0.0
    %490 = vmatprep.subr.mxu0 0.0
    %491 = vmatpush2.xpose.msra.mxu0 0.0
    %492 = vmatprep.subr.mxu0 0.0
    %493 = vmatpush2.xpose.msra.mxu0 0.0
    %494 = vmatprep.subr.mxu0 0.0
    %495 = vmatpush2.xpose.msra.mxu0 0.0
    %496 = vmatprep.subr.mxu0 0.0
    %497 = vmatpush2.xpose.msra.mxu0 0.0
    %498 = vmatprep.subr.mxu0 0.0
    %499 = vmatpush2.xpose.msra.mxu0 0.0
    %500 = vmatprep.subr.mxu0 0.0
    %501 = vmatpush2.xpose.msra.mxu0 0.0
    %502 = vmatprep.subr.mxu0 0.0
    %503 = vmatpush2.xpose.msra.mxu0 0.0
    %504 = vmatprep.subr.mxu0 0.0
    %505 = vmatpush2.xpose.msra.mxu0 0.0
    %506 = vmatprep.subr.mxu0 0.0
    %507 = vmatpush2.xpose.msra.mxu0 0.0
    %508 = vmatprep.subr.mxu0 0.0
    %509 = vmatpush2.xpose.msra.mxu0 0.0
    %510 = vmatprep.subr.mxu0 0.0
    %511 = vmatpush2.xpose.msra.mxu0 0.0
    %512 = vmatprep.mubr.f32.mxu0 0.0
    %513 = vmatmul.mubr.f32.gmra.mxu0 %v443
    %v514 = vpop.f32.mrf.mxu0
    %v515 = vadd.f32 0.0, %v514
    %v516 = vpop.f32.mrf.mxu0
    %517 = vdwg.mxu0
    %vm518 = vcmp.ne.f32.partialorder %v515, 0.0
    %v519 = vsel %vm518, 1, 0
    %v520 = vsel %vm330, %v519, 0
    %v521 = vand.u32 %v520, 65535
    %v522 = vshrl.u32 %v520, 16
    %v523 = vcvt.s32.f32 %v521
    %v524 = vcvt.s32.f32 %v522
    %525 = vadd.xlane.f32.xlu0 %v523
    %v526 = vpop.xlane.xlu0 %525
    %527 = vadd.xlane.f32.xlu0 %v524
    %v528 = vpop.xlane.xlu0 %527
    %v529 = vcvt.f32.s32 %v526
    %v530 = vcvt.f32.s32 %v528
    %v531 = vshll.u32 %v530, 16
    %v532 = vadd.s32 %v531, %v529
    %v533 = vrot.slane %v532, 4
    %v534 = vadd.s32 %v532, %v533
    %v535 = vrot.slane %v534, 2
    %v536 = vadd.s32 %v534, %v535
    %v537 = vrot.slane %v536, 1
    %v538 = vadd.s32 %v536, %v537
    %s539 = vtos %v538
    %v540 = vstv %s539
    %vm541 = vcmp.ge.s32.totalorder %v251, %v540
    %v542 = vsel %vm541, -inf, %v515
    %v543 = vsel %vm354, %v542, -inf
    %544 = vmax.xlane.f32.xlu0 %v543
    %v545 = vpop.xlane.xlu0 %544
    %v546 = vsub.f32 %v542, %v545
    %v547 = vmul.f32 %v546, 1.442695
    %v548 = vpow.pop %v547
    %v549 = vsel %vm354, %v548, 0.0
    %550 = vadd.xlane.f32.xlu0 %v549
    %v551 = vpop.xlane.xlu0 %550
    %v552 = vrcp.pop %v551
    %v553 = vmul.f32 %v548, %v552
    %554 = vrot.lane.b32.xlu0 %v247, 96
    %v555 = vpop.permute.xlu0 %554
    %v558 = vsel %vm354, %v553, 0
    %560 = vmatprep.subr.mxu0 0.0
    %561 = vmatpush1.msra.mxu0 0.0
    %562 = vmatprep.subr.mxu0 0.0
    %563 = vmatpush1.msra.mxu0 0.0
    %564 = vmatprep.subr.mxu0 0.0
    %565 = vmatpush1.msra.mxu0 0.0
    %566 = vmatprep.subr.mxu0 0.0
    %567 = vmatpush1.msra.mxu0 0.0
    %568 = vmatprep.subr.mxu0 0.0
    %569 = vmatpush1.msra.mxu0 0.0
    %570 = vmatprep.subr.mxu0 0.0
    %571 = vmatpush1.msra.mxu0 0.0
    %572 = vmatprep.subr.mxu0 0.0
    %573 = vmatpush1.msra.mxu0 0.0
    %574 = vmatprep.subr.mxu0 0.0
    %575 = vmatpush1.msra.mxu0 0.0
    %576 = vmatprep.subr.mxu0 0.0
    %577 = vmatpush1.msra.mxu0 0.0
    %578 = vmatprep.subr.mxu0 0.0
    %579 = vmatpush1.msra.mxu0 0.0
    %580 = vmatprep.subr.mxu0 0.0
    %581 = vmatpush1.msra.mxu0 0.0
    %582 = vmatprep.subr.mxu0 0.0
    %583 = vmatpush1.msra.mxu0 0.0
    %584 = vmatprep.subr.mxu0 0.0
    %585 = vmatpush1.msra.mxu0 0.0
    %586 = vmatprep.subr.mxu0 0.0
    %587 = vmatpush1.msra.mxu0 0.0
    %588 = vmatprep.subr.mxu0 0.0
    %589 = vmatpush1.msra.mxu0 0.0
    %590 = vmatprep.subr.mxu0 0.0
    %591 = vmatpush1.msra.mxu0 %v555
    %592 = vmatprep.subr.mxu0 0.0
    %593 = vmatpush2.msra.mxu0 0.0
    %594 = vmatprep.subr.mxu0 0.0
    %595 = vmatpush2.msra.mxu0 0.0
    %596 = vmatprep.subr.mxu0 0.0
    %597 = vmatpush2.msra.mxu0 0.0
    %598 = vmatprep.subr.mxu0 0.0
    %599 = vmatpush2.msra.mxu0 0.0
    %600 = vmatprep.subr.mxu0 0.0
    %601 = vmatpush2.msra.mxu0 0.0
    %602 = vmatprep.subr.mxu0 0.0
    %603 = vmatpush2.msra.mxu0 0.0
    %604 = vmatprep.subr.mxu0 0.0
    %605 = vmatpush2.msra.mxu0 0.0
    %606 = vmatprep.subr.mxu0 0.0
    %607 = vmatpush2.msra.mxu0 0.0
    %608 = vmatprep.subr.mxu0 0.0
    %609 = vmatpush2.msra.mxu0 0.0
    %610 = vmatprep.subr.mxu0 0.0
    %611 = vmatpush2.msra.mxu0 0.0
    %612 = vmatprep.subr.mxu0 0.0
    %613 = vmatpush2.msra.mxu0 0.0
    %614 = vmatprep.subr.mxu0 0.0
    %615 = vmatpush2.msra.mxu0 0.0
    %616 = vmatprep.subr.mxu0 0.0
    %617 = vmatpush2.msra.mxu0 0.0
    %618 = vmatprep.subr.mxu0 0.0
    %619 = vmatpush2.msra.mxu0 0.0
    %620 = vmatprep.subr.mxu0 0.0
    %621 = vmatpush2.msra.mxu0 0.0
    %622 = vmatprep.subr.mxu0 0.0
    %623 = vmatpush2.msra.mxu0 0.0
    %624 = vmatprep.mubr.f32.mxu0 0.0
    %625 = vmatmul.mubr.f32.gmra.mxu0 %v558
    %v626 = vpop.f32.mrf.mxu0
    %v627 = vadd.f32 0.0, %v626
    %v628 = vpop.f32.mrf.mxu0
    %629 = vdwg.mxu0
    %630 = vst.msk [vmem:[#allocation10] sm:$0xff] %vm79, %v439
    %631 = vst.msk [vmem:[#allocation10 + $0x8] sm:$0xff] %vm79, %v627
    // Predicated region
    $region34: #{tpu_custom_call.1} parent=1 // pred_check
      _
    $region35: #{tpu_custom_call.1} parent=1 // pred_check_branch
      %633 = sbr.rel (0) target = $region37
    $region36: #{tpu_custom_call.1} parent=1 // pred_region
      %s635 = ssub.s32 256, 256
      %636 = vsyncadd [#allocation4], %s635
      %s637 = sshll.u32 [#allocation10], 4
      %s638 = int_to_ptr.vmem [resolvable:$true] %s637
      %643 = dma.vmem_to_hbm [thread:$0]  %s638, 256, %s4, [#allocation4], 128, 128, 8
    $region37: #{tpu_custom_call.1} parent=1 // pred_fallthru
      _
    // Predicated region
    $region38: #{tpu_custom_call.1} parent=1 // pred_check
      _
    $region39: #{tpu_custom_call.1} parent=1 // pred_check_branch
      %645 = sbr.rel (0) target = $region41
    $region40: #{tpu_custom_call.1} parent=1 // pred_region
      %646 = dma.done [#allocation4], 256
    $region41: #{tpu_custom_call.1} parent=1 // pred_fallthru
      _
    %647 = vsyncpa [#allocation3], 1
    %648 = vsyncpa [#allocation6], 1
    %649 = vsyncpa [#allocation9], 1
    %650 = vsyncpa [#allocation4], 1

</llo_original>
